<compile_context>
chip_gen: v5e
topology: v5e:2x2
jax: 0.10.0
libtpu: 0.0.40
codegen_flags: <defaults>
</compile_context>

<pallas_src>
import functools
import math

import jax
import jax.numpy as jnp
from jax.experimental import pallas as pl
from jax.experimental.pallas import tpu as pltpu

MAX_LENGTH = 300


def _build_pos_table(dim: int, max_length: int) -> jnp.ndarray:
    """Sinusoidal positional-encoding table, f32, shape (1, max_length, dim)."""
    assert dim % 2 == 0
    d = jnp.exp(jnp.arange(0.0, dim, 2.0, dtype=jnp.float32)
                * (-math.log(10000.0) / dim))                           # (dim/2,)
    position = jnp.arange(0.0, max_length, dtype=jnp.float32)[:, None]  # (L, 1)
    angles = position * d                                               # (L, dim/2)
    pe = jnp.zeros((max_length, dim), dtype=jnp.float32)
    pe = pe.at[:, 0::2].set(jnp.sin(angles))
    pe = pe.at[:, 1::2].set(jnp.cos(angles))
    return pe[None, :, :]                                               # (1, L, dim)


def _add_pos_kernel(x_ref, pos_ref, o_ref):
    # x_ref / o_ref: (BB, TT, D) tiles in x.dtype; pos_ref: (1, TT, D) f32.
    # Add in f32 (matches torch's promotion of bf16 x + f32 buffer), cast on store.
    o_ref[...] = (x_ref[...].astype(jnp.float32) + pos_ref[...]).astype(o_ref.dtype)


@functools.lru_cache(maxsize=1)
def _tpu_mem_params():
    """(tile_budget_bytes, vmem_limit_bytes, num_tensorcores) for this chip."""
    vmem = 64 * 1024 * 1024   # conservative default: v7x per-core VMEM
    cores = 1                 # conservative default: v5e/v6e have 1 TC/chip
    try:
        info = pltpu.get_tpu_info()
        vmem = int(getattr(info, "vmem_capacity_bytes", vmem)) or vmem
        for name in ("num_cores", "num_tensorcores", "tensorcore_count"):
            val = getattr(info, name, None)
            if val:
                cores = int(val)
                break
    except Exception:
        pass
    budget = int(min(max((vmem * 3) // 8, 16 << 20), 64 << 20))
    limit = int(min(max((vmem * 3) // 4, 2 * budget), vmem))
    return budget, limit, cores


def _round_up(n: int, m: int) -> int:
    return ((n + m - 1) // m) * m


def _choose_tiles(B, T, D, itemsize, budget_bytes, num_cores):
    """Pick (BB, TT) for (BB, TT, D) x/out blocks and a (1, TT, D) pos block."""
    sub = {4: 8, 2: 16, 1: 32}.get(itemsize, 8)    # dtype-aware sublane multiple
    d_pad = _round_up(D, 128)                       # VMEM lane padding
    x_row = _round_up(T, sub) * d_pad * itemsize    # one batch element of x in VMEM
    pos_blk = _round_up(T, 8) * d_pad * 4           # resident pos block (f32)

    # Case 1: a full-(T, D) slab per batch element fits -> block over batch only.
    max_bb = (budget_bytes - 2 * pos_blk) // (4 * x_row)   # 2x dbl-buffered x + out
    if max_bb >= 1:
        bb = int(min(B, max_bb))
        if num_cores > 1:
            target = 2 * num_cores   # >=2 grid points per TC: overlap + load balance
            if B >= target and pl.cdiv(B, bb) < target:
                bb = max(1, pl.cdiv(B, target))
        return int(bb), int(T)

    # Case 2 (very large T*D, e.g. v7x long sequences): tile the T axis as well.
    per_trow = d_pad * (4 * itemsize + 2 * 4)       # 2x(x) + 2x(out) + 2x(pos) per row
    tt = max(sub, (budget_bytes // max(per_trow, 1) // sub) * sub)
    tt = min(int(tt), T)                            # if clamped to T -> full dim, legal
    return 1, int(tt)


def position_encode_1d(x: jnp.ndarray, pos: jnp.ndarray, *,
                       in_place: bool = False) -> jnp.ndarray:
    """x: (B, T, D); pos: (1, max_length >= T, D) f32 table. Returns x + pos[:, :T]."""
    B, T, D = x.shape
    assert pos.shape[0] == 1 and pos.shape[2] == D and pos.shape[1] >= T

    # Stay 3-D end to end: no (B,T,D)<->(B,T*D) reshapes, so no XLA relayout
    # copies around the pallas_call.  pos stays f32; the kernel adds in f32 and
    # casts to x.dtype on store.  NOTE: relies on pos being laid out (L, D)
    # row-major so [:, :T, :] is a contiguous prefix of the table.
    pos_t = pos[:, :T, :].astype(jnp.float32)

    itemsize = jnp.dtype(x.dtype).itemsize
    budget, vmem_limit, num_cores = _tpu_mem_params()
    bb, tt = _choose_tiles(B, T, D, itemsize, budget, num_cores)
    grid = (pl.cdiv(B, bb), pl.cdiv(T, tt))

    extra_kwargs = {}
    if in_place:
        # Footprint-only: reuses x's HBM buffer for the output (does NOT reduce
        # HBM traffic — the tile is still read and written).  Only safe if the
        # caller no longer needs x.
        extra_kwargs["input_output_aliases"] = {0: 0}

    bytes_accessed = 2 * x.size * itemsize + pos_t.size * 4
    cost = pl.CostEstimate(flops=int(x.size), transcendentals=0,
                           bytes_accessed=int(bytes_accessed))

    return pl.pallas_call(
        _add_pos_kernel,
        out_shape=jax.ShapeDtypeStruct((B, T, D), x.dtype),
        grid_spec=pltpu.PrefetchScalarGridSpec(
            num_scalar_prefetch=0,
            grid=grid,
            in_specs=[
                pl.BlockSpec((bb, tt, D), lambda i, j: (i, j, 0)),   # x tiles
                pl.BlockSpec((1, tt, D), lambda i, j: (0, j, 0)),    # pos (batch-bcast)
            ],
            out_specs=pl.BlockSpec((bb, tt, D), lambda i, j: (i, j, 0)),
        ),
        compiler_params=pltpu.CompilerParams(
            dimension_semantics=("parallel", "parallel"),
            vmem_limit_bytes=vmem_limit,
        ),
        cost_estimate=cost,
        **extra_kwargs,
    )(x, pos_t)


if __name__ == "__main__":
    key = jax.random.PRNGKey(0)
    k1, k2, k3, k4 = jax.random.split(key, 4)

    # --- test 1: module-sized small case (f32) ----------------------------
    B, T, D = 2, 8, 32
    x = jax.random.normal(k1, (B, T, D), dtype=jnp.float32)
    pos = _build_pos_table(D, MAX_LENGTH)
    out = jax.block_until_ready(position_encode_1d(x, pos))
    ref = x + pos[:, :T, :]
    assert out.shape == (B, T, D)
    assert jnp.allclose(out, ref, atol=1e-6), "f32 small-case mismatch"

    # --- test 2: larger batch (exercises batch blocking / multi-core split) -
    B2, T2, D2 = 16, 24, 64
    x2 = jax.random.normal(k2, (B2, T2, D2), dtype=jnp.float32)
    pos2 = _build_pos_table(D2, MAX_LENGTH)
    out2 = jax.block_until_ready(position_encode_1d(x2, pos2))
    ref2 = x2 + pos2[:, :T2, :]
    assert jnp.allclose(out2, ref2, atol=1e-6), "batch-blocked mismatch"

    # --- test 3: bf16 input (f32 accumulate in-kernel, cast on store) ------
    xb = jax.random.normal(k3, (B, T, D), dtype=jnp.bfloat16)
    outb = jax.block_until_ready(position_encode_1d(xb, pos))
    refb = (xb.astype(jnp.float32) + pos[:, :T, :]).astype(jnp.bfloat16)
    assert jnp.allclose(outb.astype(jnp.float32), refb.astype(jnp.float32),
                        atol=1e-2), "bf16 mismatch"

    # --- test 4: T not a multiple of 8 (full-dim blocks stay legal) --------
    B4, T4, D4 = 3, 13, 32
    x4 = jax.random.normal(k4, (B4, T4, D4), dtype=jnp.float32)
    out4 = jax.block_until_ready(position_encode_1d(x4, pos))
    ref4 = x4 + pos[:, :T4, :]
    assert jnp.allclose(out4, ref4, atol=1e-6), "odd-T mismatch"

    print("KERNEL_OK")
</pallas_src>

<mosaic_0001>
module attributes {stable_mosaic.version = 11 : i64} {
  func.func @_add_pos_kernel(%arg0: i32, %arg1: i32, %arg2: memref<2x8x32xf32, #tpu.memory_space<vmem>>, %arg3: memref<1x8x32xf32, #tpu.memory_space<vmem>>, %arg4: memref<2x8x32xf32, #tpu.memory_space<vmem>>) attributes {dimension_semantics = [#tpu.dimension_semantics<parallel>, #tpu.dimension_semantics<parallel>], iteration_bounds = array<i64: 1, 1>, scalar_prefetch = 0 : i64, scratch_operands = 0 : i64, tpu.core_type = #tpu.core_type<tc>, window_params = [{transform_indices = @transform_0, window_bounds = array<i64: 2, 8, 32>}, {transform_indices = @transform_1, window_bounds = array<i64: 1, 8, 32>}, {transform_indices = @transform_2, window_bounds = array<i64: 2, 8, 32>}]} {
    %c0 = arith.constant 0 : index
    %c0_0 = arith.constant 0 : index
    %c0_1 = arith.constant 0 : index
    %0 = vector.load %arg2[%c0, %c0_0, %c0_1] : memref<2x8x32xf32, #tpu.memory_space<vmem>>, vector<2x8x32xf32>
    %c0_2 = arith.constant 0 : index
    %c0_3 = arith.constant 0 : index
    %c0_4 = arith.constant 0 : index
    %1 = vector.load %arg3[%c0_2, %c0_3, %c0_4] : memref<1x8x32xf32, #tpu.memory_space<vmem>>, vector<1x8x32xf32>
    %2 = vector.broadcast %1 : vector<1x8x32xf32> to vector<2x8x32xf32>
    %3 = arith.addf %0, %2 : vector<2x8x32xf32>
    %c0_5 = arith.constant 0 : index
    %c0_6 = arith.constant 0 : index
    %c0_7 = arith.constant 0 : index
    %4 = vector.load %arg4[%c0_5, %c0_6, %c0_7] : memref<2x8x32xf32, #tpu.memory_space<vmem>>, vector<2x8x32xf32>
    tpu.vector_store %arg4[%c0_5, %c0_6, %c0_7], %3 {strides = array<i32>} : memref<2x8x32xf32, #tpu.memory_space<vmem>>, vector<2x8x32xf32>,
    return
  }
  func.func @transform_0(%arg0: i32, %arg1: i32) -> (i32, i32, i32) {
    %c0_i32 = arith.constant 0 : i32
    %c0_i32_0 = arith.constant 0 : i32
    return %arg0, %arg1, %c0_i32 : i32, i32, i32
  }
  func.func @transform_1(%arg0: i32, %arg1: i32) -> (i32, i32, i32) {
    %c0_i32 = arith.constant 0 : i32
    %c0_i32_0 = arith.constant 0 : i32
    %c0_i32_1 = arith.constant 0 : i32
    return %c0_i32, %arg1, %c0_i32_0 : i32, i32, i32
  }
  func.func @transform_2(%arg0: i32, %arg1: i32) -> (i32, i32, i32) {
    %c0_i32 = arith.constant 0 : i32
    %c0_i32_0 = arith.constant 0 : i32
    return %arg0, %arg1, %c0_i32 : i32, i32, i32
  }
}

</mosaic_0001>

<llo_original>
// kernel: tpu_custom_call.1
$region0: #{tpu_custom_call.1}
  #allocation0 [shape = 'u32[]', space=smem, size = 0x4, offset = 0x4, fixed_abs, tag = 'smem constant byte address 0x4 - core index']
  #allocation1 [shape = 'u32[72,128]{1,0:T(1,128)}', space=vmem, size = 0x9000, scoped, tag = 'internal scratch']
  %s0 = inlined_call_operand.hbm [shape: f32[2,8,32], index: 0, kind: input, shape index: {}]
  %s1 = inlined_call_operand.hbm [shape: f32[1,8,32], index: 1, kind: input, shape index: {}]
  %s2 = inlined_call_operand.hbm [shape: f32[2,8,32], index: 2, kind: output, shape index: {}]
  %s3 = sld [smem:[#allocation0]]
  $region26: #{tpu_custom_call.1} parent=0
    _
  %s5 = ssub.s32 1, %s3
  %s6 = scalar_select 0, %s5, %s3
  $region1: #{tpu_custom_call.1} parent=0
    #allocation2 [shape = 'u8[8192]{0}', space=vmem, size = 0x2000, scoped, tag = 'input window, operand 0, single buffered']
    #allocation3 [shape = 's32[1]{0}', space=sflag, size = 0x4, scoped, tag = 'scoped memory for tpu_custom_call.1']
    #allocation4 [shape = 's32[1]{0}', space=sflag, size = 0x4, scoped, tag = 'scoped memory for tpu_custom_call.1']
    #allocation5 [shape = 'u8[4096]{0}', space=vmem, size = 0x1000, scoped, tag = 'input window, operand 1, single buffered']
    #allocation6 [shape = 's32[1]{0}', space=sflag, size = 0x4, scoped, tag = 'scoped memory for tpu_custom_call.1']
    #allocation7 [shape = 'u8[8192]{0}', space=vmem, size = 0x2000, scoped, tag = 'output window, operand 0, single buffered']
    %7 = vsyncpa [#allocation3], 0
    %8 = vsyncpa [#allocation6], 0
    %9 = vsyncpa [#allocation4], 0
    // Predicated region
    $region2: #{tpu_custom_call.1} parent=1 // pred_check
      _
    $region3: #{tpu_custom_call.1} parent=1 // pred_check_branch
      %11 = sbr.rel (0) target = $region5
    $region4: #{tpu_custom_call.1} parent=1 // pred_region
      %13 = vsyncadd [#allocation3], 0
      %s14 = sshll.u32 %s0, 4
      %s15 = int_to_ptr.hbm [resolvable:$true] %s14
      %s16 = sshll.u32 [#allocation2], 4
      %s17 = int_to_ptr.vmem [resolvable:$true] %s16
      %22 = dma.hbm_to_vmem [thread:$0]  %s15, 256, %s17, [#allocation3], 128, 128, 8
    $region5: #{tpu_custom_call.1} parent=1 // pred_fallthru
      _
    // Predicated region
    $region6: #{tpu_custom_call.1} parent=1 // pred_check
      _
    $region7: #{tpu_custom_call.1} parent=1 // pred_check_branch
      %24 = sbr.rel (0) target = $region9
    $region8: #{tpu_custom_call.1} parent=1 // pred_region
      %26 = vsyncadd [#allocation6], 0
      %s28 = sshll.u32 %s1, 4
      %s29 = int_to_ptr.hbm [resolvable:$true] %s28
      %s30 = sshll.u32 [#allocation5], 4
      %s31 = int_to_ptr.vmem [resolvable:$true] %s30
      %33 = dma.hbm_to_vmem [thread:$0]  %s29, 128, %s31, [#allocation6]
    $region9: #{tpu_custom_call.1} parent=1 // pred_fallthru
      _
    // Predicated region
    $region10: #{tpu_custom_call.1} parent=1 // pred_check
      _
    $region11: #{tpu_custom_call.1} parent=1 // pred_check_branch
      %35 = sbr.rel (0) target = $region13
    $region12: #{tpu_custom_call.1} parent=1 // pred_region
      %37 = dma.done [#allocation3], 256
    $region13: #{tpu_custom_call.1} parent=1 // pred_fallthru
      _
    // Predicated region
    $region14: #{tpu_custom_call.1} parent=1 // pred_check
      _
    $region15: #{tpu_custom_call.1} parent=1 // pred_check_branch
      %39 = sbr.rel (0) target = $region17
    $region16: #{tpu_custom_call.1} parent=1 // pred_region
      %41 = dma.done [#allocation6], 128
    $region17: #{tpu_custom_call.1} parent=1 // pred_fallthru
      _
    %v42 = vld [vmem:[#allocation2] sm:$0xff]
    %v43 = vld [vmem:[#allocation2 + $0x8] sm:$0xff]
    %v44 = vld [vmem:[#allocation5] sm:$0xff]
    %v45 = vadd.f32 %v42, %v44
    %v46 = vadd.f32 %v43, %v44
    %vm47 = vcmask 261120
    %48 = vst.msk [vmem:[#allocation7] sm:$0xff] %vm47, %v45
    %49 = vst.msk [vmem:[#allocation7 + $0x8] sm:$0xff] %vm47, %v46
    // Predicated region
    $region18: #{tpu_custom_call.1} parent=1 // pred_check
      _
    $region19: #{tpu_custom_call.1} parent=1 // pred_check_branch
      %51 = sbr.rel (0) target = $region21
    $region20: #{tpu_custom_call.1} parent=1 // pred_region
      %53 = vsyncadd [#allocation4], 0
      %s54 = sshll.u32 [#allocation7], 4
      %s55 = int_to_ptr.vmem [resolvable:$true] %s54
      %s56 = sshll.u32 %s2, 4
      %s57 = int_to_ptr.hbm [resolvable:$true] %s56
      %62 = dma.vmem_to_hbm [thread:$0]  %s55, 256, %s57, [#allocation4], 128, 128, 8
    $region21: #{tpu_custom_call.1} parent=1 // pred_fallthru
      _
    // Predicated region
    $region22: #{tpu_custom_call.1} parent=1 // pred_check
      _
    $region23: #{tpu_custom_call.1} parent=1 // pred_check_branch
      %64 = sbr.rel (0) target = $region25
    $region24: #{tpu_custom_call.1} parent=1 // pred_region
      %66 = dma.done [#allocation4], 256
    $region25: #{tpu_custom_call.1} parent=1 // pred_fallthru
      _
    %67 = vsyncpa [#allocation3], 1
    %68 = vsyncpa [#allocation6], 1
    %69 = vsyncpa [#allocation4], 1

</llo_original>
